<compile_context>
chip_gen: v5e
topology: v5e:2x2
jax: 0.10.0
libtpu: 0.0.40
codegen_flags: <defaults>
</compile_context>

<pallas_src>
import jax
import jax.numpy as jnp
from jax.experimental import pallas as pl
from jax.experimental.pallas import tpu as pltpu


def _round_up(x, m):
    return ((x + m - 1) // m) * m


def _make_kernel(Hp, Wp, n_scales, out_rows):
    """Per-image kernel.  Output tile (out_rows, 128), lane-replicated:
         row s            -> image_loss at scale s (sum of grad_x + grad_y)
         row n_scales + s -> M at scale s          (sum of sub-sampled mask)
    """

    def kernel(pred_ref, targ_ref, mask_ref, out_ref):
        out_row = jax.lax.broadcasted_iota(jnp.int32, (out_rows, 128), 0)
        acc = jnp.zeros((out_rows, 128), jnp.float32)

        for s in range(n_scales):
            S = 1 << s
            Hs = Hp // S          # anchor-row count (Hp is a multiple of 8*S)

            if S == 1:
                p = pred_ref[...].astype(jnp.float32)
                t = targ_ref[...].astype(jnp.float32)
                m = mask_ref[...].astype(jnp.float32)
            else:
                # Only the 2**s-grid rows are loaded at this scale
                # (sublane-strided VMEM read, native dtype, upcast in VMEM).
                rows = pl.ds(0, Hs, stride=S)
                p = pred_ref[rows].astype(jnp.float32)
                t = targ_ref[rows].astype(jnp.float32)
                m = mask_ref[rows].astype(jnp.float32)

            d = m * (p - t)

            col = jax.lax.broadcasted_iota(jnp.int32, (Hs, Wp), 1)
            row = jax.lax.broadcasted_iota(jnp.int32, (Hs, Wp), 0)

            # Folded weight: mask * (column on the 2**s grid).  Bit-test, no %.
            if S == 1:
                w = m
            else:
                w = jnp.where((col & (S - 1)) == 0, m, 0.0)

            m_sum = jnp.sum(w, keepdims=True)                       # (1, 1)

            # grad_x: right neighbour S columns away.  Wrap column is masked;
            # neighbours in the zero-mask pad region vanish via m_r.
            d_r = pltpu.roll(d, shift=Wp - S, axis=1)    # d_r[:, j] = d[:, j+S]
            m_r = pltpu.roll(m, shift=Wp - S, axis=1)
            wx = jnp.where(col < (Wp - S), w, 0.0)
            g = jnp.abs(d_r - d) * m_r * wx

            # grad_y: next anchor row (already adjacent in the strided slab).
            d_b = pltpu.roll(d, shift=Hs - 1, axis=0)    # d_b[r, :] = d[r+1, :]
            m_b = pltpu.roll(m, shift=Hs - 1, axis=0)
            wy = jnp.where(row < (Hs - 1), w, 0.0)
            g = g + jnp.abs(d_b - d) * m_b * wy

            loss_sum = jnp.sum(g, keepdims=True)                    # (1, 1)

            acc = jnp.where(out_row == s, loss_sum, acc)
            acc = jnp.where(out_row == (n_scales + s), m_sum, acc)

        out_ref[...] = acc    # single lane/sublane-dense store per grid step

    return kernel


def _per_image_scale_sums(prediction, target, mask, n_scales):
    """Returns (loss_b, m_b), each (B, n_scales): per-image per-scale sums."""
    B, H, W = prediction.shape

    # Pad so every per-scale row-subsampled slab is (8, 128)-tile aligned:
    # Hp multiple of 8 * 2**(scales-1), Wp multiple of 128.  Pad mask is 0,
    # which makes the padded math exactly equal to the reference.
    Hp = _round_up(H, 8 * (1 << (n_scales - 1)))
    Wp = _round_up(W, 128)

    def pad(x):
        if x.shape[1] == Hp and x.shape[2] == Wp:
            return x
        return jnp.pad(x, ((0, 0), (0, Hp - H), (0, Wp - W)))

    prediction, target, mask = pad(prediction), pad(target), pad(mask)

    out_rows = max(8, _round_up(2 * n_scales, 8))
    kernel = _make_kernel(Hp, Wp, n_scales, out_rows)

    # VMEM budget: 3 double-buffered native-dtype input blocks + f32 temporaries.
    in_bytes = sum(2 * Hp * Wp * x.dtype.itemsize for x in (prediction, target, mask))
    need = in_bytes + 12 * Hp * Wp * 4 + (2 << 20)
    vmem_limit = int(min(100 * 1024 * 1024, max(32 * 1024 * 1024, need)))

    in_spec = pl.BlockSpec((None, Hp, Wp), lambda b: (b, 0, 0))
    out_spec = pl.BlockSpec((None, out_rows, 128), lambda b: (b, 0, 0))

    part = pl.pallas_call(
        kernel,
        out_shape=jax.ShapeDtypeStruct((B, out_rows, 128), jnp.float32),
        grid=(B,),
        in_specs=[in_spec, in_spec, in_spec],
        out_specs=out_spec,
        compiler_params=pltpu.CompilerParams(
            dimension_semantics=("parallel",),   # per-batch partials -> no race
            vmem_limit_bytes=vmem_limit,
        ),
    )(prediction, target, mask)

    loss_b = part[:, :n_scales, 0]                  # (B, n_scales)
    m_b = part[:, n_scales:2 * n_scales, 0]         # (B, n_scales)
    return loss_b, m_b


def gradient_loss_total(prediction, target, mask, scales=4, reduction="batch-based"):
    """Equivalent of GradientLoss(scales, reduction).forward(prediction, target, mask)."""
    loss_b, m_b = _per_image_scale_sums(prediction, target, mask, scales)

    if reduction == "batch-based":
        loss_s = jnp.sum(loss_b, axis=0)            # (scales,)
        m_s = jnp.sum(m_b, axis=0)                  # (scales,)
        safe = jnp.where(m_s == 0, jnp.float32(1.0), m_s)
        per_scale = jnp.where(m_s == 0, jnp.float32(0.0), loss_s / safe)
        return jnp.sum(per_scale)
    else:  # image-based
        safe = jnp.where(m_b == 0, jnp.float32(1.0), m_b)
        per_img = jnp.where(m_b == 0, jnp.float32(0.0), loss_b / safe)
        return jnp.sum(jnp.mean(per_img, axis=0))


# ---------------- pure-JAX reference (correctness check only) ------------------
def _ref_gradient_loss(prediction, target, mask):
    M = jnp.sum(mask, axis=(1, 2))
    diff = mask * (prediction - target)
    grad_x = jnp.abs(diff[:, :, 1:] - diff[:, :, :-1]) * (mask[:, :, 1:] * mask[:, :, :-1])
    grad_y = jnp.abs(diff[:, 1:, :] - diff[:, :-1, :]) * (mask[:, 1:, :] * mask[:, :-1, :])
    image_loss = jnp.sum(grad_x, axis=(1, 2)) + jnp.sum(grad_y, axis=(1, 2))
    divisor = jnp.sum(M)
    return jnp.where(divisor == 0, 0.0,
                     jnp.sum(image_loss) / jnp.where(divisor == 0, 1.0, divisor))


def _ref_total(prediction, target, mask, scales=4):
    total = jnp.float32(0.0)
    for scale in range(scales):
        step = 2 ** scale
        total = total + _ref_gradient_loss(
            prediction[:, ::step, ::step],
            target[:, ::step, ::step],
            mask[:, ::step, ::step],
        )
    return total


if __name__ == "__main__":
    key = jax.random.PRNGKey(0)

    def check(B, H, W, zero_mask=False):
        k1, k2, k3 = jax.random.split(jax.random.fold_in(key, H * 1000 + W), 3)
        pred = jax.random.normal(k1, (B, H, W), dtype=jnp.float32)
        targ = jax.random.normal(k2, (B, H, W), dtype=jnp.float32)
        if zero_mask:
            mask = jnp.zeros((B, H, W), dtype=jnp.float32)
        else:
            mask = (jax.random.uniform(k3, (B, H, W)) > 0.3).astype(jnp.float32)

        out = jax.block_until_ready(gradient_loss_total(pred, targ, mask, scales=4))
        ref = jax.block_until_ready(_ref_total(pred, targ, mask, scales=4))
        assert abs(float(out) - float(ref)) <= 1e-4 * max(1.0, abs(float(ref))), (
            (B, H, W, zero_mask), float(out), float(ref))

    check(2, 16, 16)                   # unaligned -> padded to (64, 128)
    check(2, 8, 128)                   # W aligned, H padded
    check(1, 64, 256)                  # fully aligned, no padding, all strides
    check(2, 16, 16, zero_mask=True)   # divisor == 0 guard -> total 0.0

    print("KERNEL_OK")
</pallas_src>

<mosaic_0001>
module attributes {stable_mosaic.version = 11 : i64} {
  func.func @kernel(%arg0: i32, %arg1: memref<1x64x128xf32, #tpu.memory_space<vmem>>, %arg2: memref<1x64x128xf32, #tpu.memory_space<vmem>>, %arg3: memref<1x64x128xf32, #tpu.memory_space<vmem>>, %arg4: memref<1x8x128xf32, #tpu.memory_space<vmem>>) attributes {dimension_semantics = [#tpu.dimension_semantics<parallel>], iteration_bounds = array<i64: 2>, scalar_prefetch = 0 : i64, scratch_operands = 0 : i64, tpu.core_type = #tpu.core_type<tc>, window_params = [{transform_indices = @transform_0, window_bounds = array<i64: 1, 64, 128>}, {transform_indices = @transform_1, window_bounds = array<i64: 1, 64, 128>}, {transform_indices = @transform_2, window_bounds = array<i64: 1, 64, 128>}, {transform_indices = @transform_3, window_bounds = array<i64: 1, 8, 128>}]} {
    %0 = tpu.iota {dimensions = array<i32: 0>} : vector<8x128xi32>
    %cst = arith.constant 0.000000e+00 : f32
    %1 = vector.broadcast %cst : f32 to vector<8x128xf32>
    %c0 = arith.constant 0 : index
    %c0_0 = arith.constant 0 : index
    %c0_1 = arith.constant 0 : index
    %2 = vector.load %arg1[%c0, %c0_0, %c0_1] : memref<1x64x128xf32, #tpu.memory_space<vmem>>, vector<1x64x128xf32>
    %3 = vector.shape_cast %2 : vector<1x64x128xf32> to vector<64x128xf32>
    %c0_2 = arith.constant 0 : index
    %c0_3 = arith.constant 0 : index
    %c0_4 = arith.constant 0 : index
    %4 = vector.load %arg2[%c0_2, %c0_3, %c0_4] : memref<1x64x128xf32, #tpu.memory_space<vmem>>, vector<1x64x128xf32>
    %5 = vector.shape_cast %4 : vector<1x64x128xf32> to vector<64x128xf32>
    %c0_5 = arith.constant 0 : index
    %c0_6 = arith.constant 0 : index
    %c0_7 = arith.constant 0 : index
    %6 = vector.load %arg3[%c0_5, %c0_6, %c0_7] : memref<1x64x128xf32, #tpu.memory_space<vmem>>, vector<1x64x128xf32>
    %7 = vector.shape_cast %6 : vector<1x64x128xf32> to vector<64x128xf32>
    %8 = arith.subf %3, %5 : vector<64x128xf32>
    %9 = arith.mulf %7, %8 : vector<64x128xf32>
    %10 = tpu.iota {dimensions = array<i32: 1>} : vector<64x128xi32>
    %11 = tpu.iota {dimensions = array<i32: 0>} : vector<64x128xi32>
    %12 = vector.shape_cast %7 : vector<64x128xf32> to vector<1x64x128xf32>
    %cst_8 = arith.constant dense<0.000000e+00> : vector<1xf32>
    %13 = vector.multi_reduction <add>, %12, %cst_8 [1, 2] : vector<1x64x128xf32> to vector<1xf32>
    %14 = vector.shape_cast %13 : vector<1xf32> to vector<1x1x1xf32>
    %15 = vector.extract %14[0, 0, 0] : f32 from vector<1x1x1xf32>
    %16 = vector.broadcast %15 : f32 to vector<1x1xf32>
    %c127_i32 = arith.constant 127 : i32
    %17 = tpu.dynamic_rotate %9 by %c127_i32 dim 1 : vector<64x128xf32>, i32 -> vector<64x128xf32>
    %c127_i32_9 = arith.constant 127 : i32
    %18 = tpu.dynamic_rotate %7 by %c127_i32_9 dim 1 : vector<64x128xf32>, i32 -> vector<64x128xf32>
    %c127_i32_10 = arith.constant 127 : i32
    %19 = vector.broadcast %c127_i32_10 : i32 to vector<64x128xi32>
    %20 = arith.cmpi slt, %10, %19 : vector<64x128xi32>
    %cst_11 = arith.constant 0.000000e+00 : f32
    %21 = vector.broadcast %cst_11 : f32 to vector<64x128xf32>
    %22 = arith.select %20, %7, %21 : vector<64x128xi1>, vector<64x128xf32>
    %23 = arith.subf %17, %9 : vector<64x128xf32>
    %24 = math.absf %23 : vector<64x128xf32>
    %25 = arith.mulf %24, %18 : vector<64x128xf32>
    %26 = arith.mulf %25, %22 : vector<64x128xf32>
    %c63_i32 = arith.constant 63 : i32
    %27 = tpu.dynamic_rotate %9 by %c63_i32 dim 0 : vector<64x128xf32>, i32 -> vector<64x128xf32>
    %c63_i32_12 = arith.constant 63 : i32
    %28 = tpu.dynamic_rotate %7 by %c63_i32_12 dim 0 : vector<64x128xf32>, i32 -> vector<64x128xf32>
    %c63_i32_13 = arith.constant 63 : i32
    %29 = vector.broadcast %c63_i32_13 : i32 to vector<64x128xi32>
    %30 = arith.cmpi slt, %11, %29 : vector<64x128xi32>
    %cst_14 = arith.constant 0.000000e+00 : f32
    %31 = vector.broadcast %cst_14 : f32 to vector<64x128xf32>
    %32 = arith.select %30, %7, %31 : vector<64x128xi1>, vector<64x128xf32>
    %33 = arith.subf %27, %9 : vector<64x128xf32>
    %34 = math.absf %33 : vector<64x128xf32>
    %35 = arith.mulf %34, %28 : vector<64x128xf32>
    %36 = arith.mulf %35, %32 : vector<64x128xf32>
    %37 = arith.addf %26, %36 : vector<64x128xf32>
    %38 = vector.shape_cast %37 : vector<64x128xf32> to vector<1x64x128xf32>
    %cst_15 = arith.constant dense<0.000000e+00> : vector<1xf32>
    %39 = vector.multi_reduction <add>, %38, %cst_15 [1, 2] : vector<1x64x128xf32> to vector<1xf32>
    %40 = vector.shape_cast %39 : vector<1xf32> to vector<1x1x1xf32>
    %41 = vector.extract %40[0, 0, 0] : f32 from vector<1x1x1xf32>
    %42 = vector.broadcast %41 : f32 to vector<1x1xf32>
    %c0_i32 = arith.constant 0 : i32
    %43 = vector.broadcast %c0_i32 : i32 to vector<8x128xi32>
    %44 = arith.cmpi eq, %0, %43 : vector<8x128xi32>
    %45 = vector.shape_cast %42 : vector<1x1xf32> to vector<1x1xf32>
    %46 = vector.broadcast %45 : vector<1x1xf32> to vector<8x128xf32>
    %47 = arith.select %44, %46, %1 : vector<8x128xi1>, vector<8x128xf32>
    %c4_i32 = arith.constant 4 : i32
    %48 = vector.broadcast %c4_i32 : i32 to vector<8x128xi32>
    %49 = arith.cmpi eq, %0, %48 : vector<8x128xi32>
    %50 = vector.shape_cast %16 : vector<1x1xf32> to vector<1x1xf32>
    %51 = vector.broadcast %50 : vector<1x1xf32> to vector<8x128xf32>
    %52 = arith.select %49, %51, %47 : vector<8x128xi1>, vector<8x128xf32>
    %c0_16 = arith.constant 0 : index
    %c0_17 = arith.constant 0 : index
    %c0_18 = arith.constant 0 : index
    %53 = tpu.strided_load %arg1[%c0_16, %c0_17, %c0_18] {strides = array<i32: 1, 2, 1>} : memref<1x64x128xf32, #tpu.memory_space<vmem>>, vector<1x32x128xf32>
    %54 = vector.shape_cast %53 : vector<1x32x128xf32> to vector<32x128xf32>
    %c0_19 = arith.constant 0 : index
    %c0_20 = arith.constant 0 : index
    %c0_21 = arith.constant 0 : index
    %55 = tpu.strided_load %arg2[%c0_19, %c0_20, %c0_21] {strides = array<i32: 1, 2, 1>} : memref<1x64x128xf32, #tpu.memory_space<vmem>>, vector<1x32x128xf32>
    %56 = vector.shape_cast %55 : vector<1x32x128xf32> to vector<32x128xf32>
    %c0_22 = arith.constant 0 : index
    %c0_23 = arith.constant 0 : index
    %c0_24 = arith.constant 0 : index
    %57 = tpu.strided_load %arg3[%c0_22, %c0_23, %c0_24] {strides = array<i32: 1, 2, 1>} : memref<1x64x128xf32, #tpu.memory_space<vmem>>, vector<1x32x128xf32>
    %58 = vector.shape_cast %57 : vector<1x32x128xf32> to vector<32x128xf32>
    %59 = arith.subf %54, %56 : vector<32x128xf32>
    %60 = arith.mulf %58, %59 : vector<32x128xf32>
    %61 = tpu.iota {dimensions = array<i32: 1>} : vector<32x128xi32>
    %62 = tpu.iota {dimensions = array<i32: 0>} : vector<32x128xi32>
    %c1_i32 = arith.constant 1 : i32
    %63 = vector.broadcast %c1_i32 : i32 to vector<32x128xi32>
    %64 = arith.andi %61, %63 : vector<32x128xi32>
    %c0_i32_25 = arith.constant 0 : i32
    %65 = vector.broadcast %c0_i32_25 : i32 to vector<32x128xi32>
    %66 = arith.cmpi eq, %64, %65 : vector<32x128xi32>
    %cst_26 = arith.constant 0.000000e+00 : f32
    %67 = vector.broadcast %cst_26 : f32 to vector<32x128xf32>
    %68 = arith.select %66, %58, %67 : vector<32x128xi1>, vector<32x128xf32>
    %69 = vector.shape_cast %68 : vector<32x128xf32> to vector<1x32x128xf32>
    %cst_27 = arith.constant dense<0.000000e+00> : vector<1xf32>
    %70 = vector.multi_reduction <add>, %69, %cst_27 [1, 2] : vector<1x32x128xf32> to vector<1xf32>
    %71 = vector.shape_cast %70 : vector<1xf32> to vector<1x1x1xf32>
    %72 = vector.extract %71[0, 0, 0] : f32 from vector<1x1x1xf32>
    %73 = vector.broadcast %72 : f32 to vector<1x1xf32>
    %c126_i32 = arith.constant 126 : i32
    %74 = tpu.dynamic_rotate %60 by %c126_i32 dim 1 : vector<32x128xf32>, i32 -> vector<32x128xf32>
    %c126_i32_28 = arith.constant 126 : i32
    %75 = tpu.dynamic_rotate %58 by %c126_i32_28 dim 1 : vector<32x128xf32>, i32 -> vector<32x128xf32>
    %c126_i32_29 = arith.constant 126 : i32
    %76 = vector.broadcast %c126_i32_29 : i32 to vector<32x128xi32>
    %77 = arith.cmpi slt, %61, %76 : vector<32x128xi32>
    %cst_30 = arith.constant 0.000000e+00 : f32
    %78 = vector.broadcast %cst_30 : f32 to vector<32x128xf32>
    %79 = arith.select %77, %68, %78 : vector<32x128xi1>, vector<32x128xf32>
    %80 = arith.subf %74, %60 : vector<32x128xf32>
    %81 = math.absf %80 : vector<32x128xf32>
    %82 = arith.mulf %81, %75 : vector<32x128xf32>
    %83 = arith.mulf %82, %79 : vector<32x128xf32>
    %c31_i32 = arith.constant 31 : i32
    %84 = tpu.dynamic_rotate %60 by %c31_i32 dim 0 : vector<32x128xf32>, i32 -> vector<32x128xf32>
    %c31_i32_31 = arith.constant 31 : i32
    %85 = tpu.dynamic_rotate %58 by %c31_i32_31 dim 0 : vector<32x128xf32>, i32 -> vector<32x128xf32>
    %c31_i32_32 = arith.constant 31 : i32
    %86 = vector.broadcast %c31_i32_32 : i32 to vector<32x128xi32>
    %87 = arith.cmpi slt, %62, %86 : vector<32x128xi32>
    %cst_33 = arith.constant 0.000000e+00 : f32
    %88 = vector.broadcast %cst_33 : f32 to vector<32x128xf32>
    %89 = arith.select %87, %68, %88 : vector<32x128xi1>, vector<32x128xf32>
    %90 = arith.subf %84, %60 : vector<32x128xf32>
    %91 = math.absf %90 : vector<32x128xf32>
    %92 = arith.mulf %91, %85 : vector<32x128xf32>
    %93 = arith.mulf %92, %89 : vector<32x128xf32>
    %94 = arith.addf %83, %93 : vector<32x128xf32>
    %95 = vector.shape_cast %94 : vector<32x128xf32> to vector<1x32x128xf32>
    %cst_34 = arith.constant dense<0.000000e+00> : vector<1xf32>
    %96 = vector.multi_reduction <add>, %95, %cst_34 [1, 2] : vector<1x32x128xf32> to vector<1xf32>
    %97 = vector.shape_cast %96 : vector<1xf32> to vector<1x1x1xf32>
    %98 = vector.extract %97[0, 0, 0] : f32 from vector<1x1x1xf32>
    %99 = vector.broadcast %98 : f32 to vector<1x1xf32>
    %c1_i32_35 = arith.constant 1 : i32
    %100 = vector.broadcast %c1_i32_35 : i32 to vector<8x128xi32>
    %101 = arith.cmpi eq, %0, %100 : vector<8x128xi32>
    %102 = vector.shape_cast %99 : vector<1x1xf32> to vector<1x1xf32>
    %103 = vector.broadcast %102 : vector<1x1xf32> to vector<8x128xf32>
    %104 = arith.select %101, %103, %52 : vector<8x128xi1>, vector<8x128xf32>
    %c5_i32 = arith.constant 5 : i32
    %105 = vector.broadcast %c5_i32 : i32 to vector<8x128xi32>
    %106 = arith.cmpi eq, %0, %105 : vector<8x128xi32>
    %107 = vector.shape_cast %73 : vector<1x1xf32> to vector<1x1xf32>
    %108 = vector.broadcast %107 : vector<1x1xf32> to vector<8x128xf32>
    %109 = arith.select %106, %108, %104 : vector<8x128xi1>, vector<8x128xf32>
    %c0_36 = arith.constant 0 : index
    %c0_37 = arith.constant 0 : index
    %c0_38 = arith.constant 0 : index
    %110 = tpu.strided_load %arg1[%c0_36, %c0_37, %c0_38] {strides = array<i32: 1, 4, 1>} : memref<1x64x128xf32, #tpu.memory_space<vmem>>, vector<1x16x128xf32>
    %111 = vector.shape_cast %110 : vector<1x16x128xf32> to vector<16x128xf32>
    %c0_39 = arith.constant 0 : index
    %c0_40 = arith.constant 0 : index
    %c0_41 = arith.constant 0 : index
    %112 = tpu.strided_load %arg2[%c0_39, %c0_40, %c0_41] {strides = array<i32: 1, 4, 1>} : memref<1x64x128xf32, #tpu.memory_space<vmem>>, vector<1x16x128xf32>
    %113 = vector.shape_cast %112 : vector<1x16x128xf32> to vector<16x128xf32>
    %c0_42 = arith.constant 0 : index
    %c0_43 = arith.constant 0 : index
    %c0_44 = arith.constant 0 : index
    %114 = tpu.strided_load %arg3[%c0_42, %c0_43, %c0_44] {strides = array<i32: 1, 4, 1>} : memref<1x64x128xf32, #tpu.memory_space<vmem>>, vector<1x16x128xf32>
    %115 = vector.shape_cast %114 : vector<1x16x128xf32> to vector<16x128xf32>
    %116 = arith.subf %111, %113 : vector<16x128xf32>
    %117 = arith.mulf %115, %116 : vector<16x128xf32>
    %118 = tpu.iota {dimensions = array<i32: 1>} : vector<16x128xi32>
    %119 = tpu.iota {dimensions = array<i32: 0>} : vector<16x128xi32>
    %c3_i32 = arith.constant 3 : i32
    %120 = vector.broadcast %c3_i32 : i32 to vector<16x128xi32>
    %121 = arith.andi %118, %120 : vector<16x128xi32>
    %c0_i32_45 = arith.constant 0 : i32
    %122 = vector.broadcast %c0_i32_45 : i32 to vector<16x128xi32>
    %123 = arith.cmpi eq, %121, %122 : vector<16x128xi32>
    %cst_46 = arith.constant 0.000000e+00 : f32
    %124 = vector.broadcast %cst_46 : f32 to vector<16x128xf32>
    %125 = arith.select %123, %115, %124 : vector<16x128xi1>, vector<16x128xf32>
    %126 = vector.shape_cast %125 : vector<16x128xf32> to vector<1x16x128xf32>
    %cst_47 = arith.constant dense<0.000000e+00> : vector<1xf32>
    %127 = vector.multi_reduction <add>, %126, %cst_47 [1, 2] : vector<1x16x128xf32> to vector<1xf32>
    %128 = vector.shape_cast %127 : vector<1xf32> to vector<1x1x1xf32>
    %129 = vector.extract %128[0, 0, 0] : f32 from vector<1x1x1xf32>
    %130 = vector.broadcast %129 : f32 to vector<1x1xf32>
    %c124_i32 = arith.constant 124 : i32
    %131 = tpu.dynamic_rotate %117 by %c124_i32 dim 1 : vector<16x128xf32>, i32 -> vector<16x128xf32>
    %c124_i32_48 = arith.constant 124 : i32
    %132 = tpu.dynamic_rotate %115 by %c124_i32_48 dim 1 : vector<16x128xf32>, i32 -> vector<16x128xf32>
    %c124_i32_49 = arith.constant 124 : i32
    %133 = vector.broadcast %c124_i32_49 : i32 to vector<16x128xi32>
    %134 = arith.cmpi slt, %118, %133 : vector<16x128xi32>
    %cst_50 = arith.constant 0.000000e+00 : f32
    %135 = vector.broadcast %cst_50 : f32 to vector<16x128xf32>
    %136 = arith.select %134, %125, %135 : vector<16x128xi1>, vector<16x128xf32>
    %137 = arith.subf %131, %117 : vector<16x128xf32>
    %138 = math.absf %137 : vector<16x128xf32>
    %139 = arith.mulf %138, %132 : vector<16x128xf32>
    %140 = arith.mulf %139, %136 : vector<16x128xf32>
    %c15_i32 = arith.constant 15 : i32
    %141 = tpu.dynamic_rotate %117 by %c15_i32 dim 0 : vector<16x128xf32>, i32 -> vector<16x128xf32>
    %c15_i32_51 = arith.constant 15 : i32
    %142 = tpu.dynamic_rotate %115 by %c15_i32_51 dim 0 : vector<16x128xf32>, i32 -> vector<16x128xf32>
    %c15_i32_52 = arith.constant 15 : i32
    %143 = vector.broadcast %c15_i32_52 : i32 to vector<16x128xi32>
    %144 = arith.cmpi slt, %119, %143 : vector<16x128xi32>
    %cst_53 = arith.constant 0.000000e+00 : f32
    %145 = vector.broadcast %cst_53 : f32 to vector<16x128xf32>
    %146 = arith.select %144, %125, %145 : vector<16x128xi1>, vector<16x128xf32>
    %147 = arith.subf %141, %117 : vector<16x128xf32>
    %148 = math.absf %147 : vector<16x128xf32>
    %149 = arith.mulf %148, %142 : vector<16x128xf32>
    %150 = arith.mulf %149, %146 : vector<16x128xf32>
    %151 = arith.addf %140, %150 : vector<16x128xf32>
    %152 = vector.shape_cast %151 : vector<16x128xf32> to vector<1x16x128xf32>
    %cst_54 = arith.constant dense<0.000000e+00> : vector<1xf32>
    %153 = vector.multi_reduction <add>, %152, %cst_54 [1, 2] : vector<1x16x128xf32> to vector<1xf32>
    %154 = vector.shape_cast %153 : vector<1xf32> to vector<1x1x1xf32>
    %155 = vector.extract %154[0, 0, 0] : f32 from vector<1x1x1xf32>
    %156 = vector.broadcast %155 : f32 to vector<1x1xf32>
    %c2_i32 = arith.constant 2 : i32
    %157 = vector.broadcast %c2_i32 : i32 to vector<8x128xi32>
    %158 = arith.cmpi eq, %0, %157 : vector<8x128xi32>
    %159 = vector.shape_cast %156 : vector<1x1xf32> to vector<1x1xf32>
    %160 = vector.broadcast %159 : vector<1x1xf32> to vector<8x128xf32>
    %161 = arith.select %158, %160, %109 : vector<8x128xi1>, vector<8x128xf32>
    %c6_i32 = arith.constant 6 : i32
    %162 = vector.broadcast %c6_i32 : i32 to vector<8x128xi32>
    %163 = arith.cmpi eq, %0, %162 : vector<8x128xi32>
    %164 = vector.shape_cast %130 : vector<1x1xf32> to vector<1x1xf32>
    %165 = vector.broadcast %164 : vector<1x1xf32> to vector<8x128xf32>
    %166 = arith.select %163, %165, %161 : vector<8x128xi1>, vector<8x128xf32>
    %c0_55 = arith.constant 0 : index
    %c0_56 = arith.constant 0 : index
    %c0_57 = arith.constant 0 : index
    %167 = tpu.strided_load %arg1[%c0_55, %c0_56, %c0_57] {strides = array<i32: 1, 8, 1>} : memref<1x64x128xf32, #tpu.memory_space<vmem>>, vector<1x8x128xf32>
    %168 = vector.shape_cast %167 : vector<1x8x128xf32> to vector<8x128xf32>
    %c0_58 = arith.constant 0 : index
    %c0_59 = arith.constant 0 : index
    %c0_60 = arith.constant 0 : index
    %169 = tpu.strided_load %arg2[%c0_58, %c0_59, %c0_60] {strides = array<i32: 1, 8, 1>} : memref<1x64x128xf32, #tpu.memory_space<vmem>>, vector<1x8x128xf32>
    %170 = vector.shape_cast %169 : vector<1x8x128xf32> to vector<8x128xf32>
    %c0_61 = arith.constant 0 : index
    %c0_62 = arith.constant 0 : index
    %c0_63 = arith.constant 0 : index
    %171 = tpu.strided_load %arg3[%c0_61, %c0_62, %c0_63] {strides = array<i32: 1, 8, 1>} : memref<1x64x128xf32, #tpu.memory_space<vmem>>, vector<1x8x128xf32>
    %172 = vector.shape_cast %171 : vector<1x8x128xf32> to vector<8x128xf32>
    %173 = arith.subf %168, %170 : vector<8x128xf32>
    %174 = arith.mulf %172, %173 : vector<8x128xf32>
    %175 = tpu.iota {dimensions = array<i32: 1>} : vector<8x128xi32>
    %176 = tpu.iota {dimensions = array<i32: 0>} : vector<8x128xi32>
    %c7_i32 = arith.constant 7 : i32
    %177 = vector.broadcast %c7_i32 : i32 to vector<8x128xi32>
    %178 = arith.andi %175, %177 : vector<8x128xi32>
    %c0_i32_64 = arith.constant 0 : i32
    %179 = vector.broadcast %c0_i32_64 : i32 to vector<8x128xi32>
    %180 = arith.cmpi eq, %178, %179 : vector<8x128xi32>
    %cst_65 = arith.constant 0.000000e+00 : f32
    %181 = vector.broadcast %cst_65 : f32 to vector<8x128xf32>
    %182 = arith.select %180, %172, %181 : vector<8x128xi1>, vector<8x128xf32>
    %183 = vector.shape_cast %182 : vector<8x128xf32> to vector<1x8x128xf32>
    %cst_66 = arith.constant dense<0.000000e+00> : vector<1xf32>
    %184 = vector.multi_reduction <add>, %183, %cst_66 [1, 2] : vector<1x8x128xf32> to vector<1xf32>
    %185 = vector.shape_cast %184 : vector<1xf32> to vector<1x1x1xf32>
    %186 = vector.extract %185[0, 0, 0] : f32 from vector<1x1x1xf32>
    %187 = vector.broadcast %186 : f32 to vector<1x1xf32>
    %c120_i32 = arith.constant 120 : i32
    %188 = tpu.dynamic_rotate %174 by %c120_i32 dim 1 : vector<8x128xf32>, i32 -> vector<8x128xf32>
    %c120_i32_67 = arith.constant 120 : i32
    %189 = tpu.dynamic_rotate %172 by %c120_i32_67 dim 1 : vector<8x128xf32>, i32 -> vector<8x128xf32>
    %c120_i32_68 = arith.constant 120 : i32
    %190 = vector.broadcast %c120_i32_68 : i32 to vector<8x128xi32>
    %191 = arith.cmpi slt, %175, %190 : vector<8x128xi32>
    %cst_69 = arith.constant 0.000000e+00 : f32
    %192 = vector.broadcast %cst_69 : f32 to vector<8x128xf32>
    %193 = arith.select %191, %182, %192 : vector<8x128xi1>, vector<8x128xf32>
    %194 = arith.subf %188, %174 : vector<8x128xf32>
    %195 = math.absf %194 : vector<8x128xf32>
    %196 = arith.mulf %195, %189 : vector<8x128xf32>
    %197 = arith.mulf %196, %193 : vector<8x128xf32>
    %c7_i32_70 = arith.constant 7 : i32
    %198 = tpu.dynamic_rotate %174 by %c7_i32_70 dim 0 : vector<8x128xf32>, i32 -> vector<8x128xf32>
    %c7_i32_71 = arith.constant 7 : i32
    %199 = tpu.dynamic_rotate %172 by %c7_i32_71 dim 0 : vector<8x128xf32>, i32 -> vector<8x128xf32>
    %c7_i32_72 = arith.constant 7 : i32
    %200 = vector.broadcast %c7_i32_72 : i32 to vector<8x128xi32>
    %201 = arith.cmpi slt, %176, %200 : vector<8x128xi32>
    %cst_73 = arith.constant 0.000000e+00 : f32
    %202 = vector.broadcast %cst_73 : f32 to vector<8x128xf32>
    %203 = arith.select %201, %182, %202 : vector<8x128xi1>, vector<8x128xf32>
    %204 = arith.subf %198, %174 : vector<8x128xf32>
    %205 = math.absf %204 : vector<8x128xf32>
    %206 = arith.mulf %205, %199 : vector<8x128xf32>
    %207 = arith.mulf %206, %203 : vector<8x128xf32>
    %208 = arith.addf %197, %207 : vector<8x128xf32>
    %209 = vector.shape_cast %208 : vector<8x128xf32> to vector<1x8x128xf32>
    %cst_74 = arith.constant dense<0.000000e+00> : vector<1xf32>
    %210 = vector.multi_reduction <add>, %209, %cst_74 [1, 2] : vector<1x8x128xf32> to vector<1xf32>
    %211 = vector.shape_cast %210 : vector<1xf32> to vector<1x1x1xf32>
    %212 = vector.extract %211[0, 0, 0] : f32 from vector<1x1x1xf32>
    %213 = vector.broadcast %212 : f32 to vector<1x1xf32>
    %c3_i32_75 = arith.constant 3 : i32
    %214 = vector.broadcast %c3_i32_75 : i32 to vector<8x128xi32>
    %215 = arith.cmpi eq, %0, %214 : vector<8x128xi32>
    %216 = vector.shape_cast %213 : vector<1x1xf32> to vector<1x1xf32>
    %217 = vector.broadcast %216 : vector<1x1xf32> to vector<8x128xf32>
    %218 = arith.select %215, %217, %166 : vector<8x128xi1>, vector<8x128xf32>
    %c7_i32_76 = arith.constant 7 : i32
    %219 = vector.broadcast %c7_i32_76 : i32 to vector<8x128xi32>
    %220 = arith.cmpi eq, %0, %219 : vector<8x128xi32>
    %221 = vector.shape_cast %187 : vector<1x1xf32> to vector<1x1xf32>
    %222 = vector.broadcast %221 : vector<1x1xf32> to vector<8x128xf32>
    %223 = arith.select %220, %222, %218 : vector<8x128xi1>, vector<8x128xf32>
    %c0_77 = arith.constant 0 : index
    %c0_78 = arith.constant 0 : index
    %c0_79 = arith.constant 0 : index
    %224 = vector.load %arg4[%c0_77, %c0_78, %c0_79] : memref<1x8x128xf32, #tpu.memory_space<vmem>>, vector<1x8x128xf32>
    %225 = vector.shape_cast %224 : vector<1x8x128xf32> to vector<8x128xf32>
    %226 = vector.shape_cast %223 : vector<8x128xf32> to vector<1x8x128xf32>
    tpu.vector_store %arg4[%c0_77, %c0_78, %c0_79], %226 {strides = array<i32>} : memref<1x8x128xf32, #tpu.memory_space<vmem>>, vector<1x8x128xf32>,
    return
  }
  func.func @transform_0(%arg0: i32) -> (i32, i32, i32) {
    %c0_i32 = arith.constant 0 : i32
    %c0_i32_0 = arith.constant 0 : i32
    %c0_i32_1 = arith.constant 0 : i32
    return %arg0, %c0_i32, %c0_i32_0 : i32, i32, i32
  }
  func.func @transform_1(%arg0: i32) -> (i32, i32, i32) {
    %c0_i32 = arith.constant 0 : i32
    %c0_i32_0 = arith.constant 0 : i32
    %c0_i32_1 = arith.constant 0 : i32
    return %arg0, %c0_i32, %c0_i32_0 : i32, i32, i32
  }
  func.func @transform_2(%arg0: i32) -> (i32, i32, i32) {
    %c0_i32 = arith.constant 0 : i32
    %c0_i32_0 = arith.constant 0 : i32
    %c0_i32_1 = arith.constant 0 : i32
    return %arg0, %c0_i32, %c0_i32_0 : i32, i32, i32
  }
  func.func @transform_3(%arg0: i32) -> (i32, i32, i32) {
    %c0_i32 = arith.constant 0 : i32
    %c0_i32_0 = arith.constant 0 : i32
    %c0_i32_1 = arith.constant 0 : i32
    return %arg0, %c0_i32, %c0_i32_0 : i32, i32, i32
  }
}

</mosaic_0001>

<llo_original>
// kernel: tpu_custom_call.1
$region0: #{tpu_custom_call.1}
  #allocation0 [shape = 'u32[]', space=smem, size = 0x4, offset = 0x4, fixed_abs, tag = 'smem constant byte address 0x4 - core index']
  #allocation1 [shape = 'u32[72,128]{1,0:T(1,128)}', space=vmem, size = 0x9000, scoped, tag = 'internal scratch']
  %s0 = inlined_call_operand.hbm [shape: f32[2,64,128], index: 0, kind: input, shape index: {}]
  %s1 = inlined_call_operand.hbm [shape: f32[2,64,128], index: 1, kind: input, shape index: {}]
  %s2 = inlined_call_operand.hbm [shape: f32[2,64,128], index: 2, kind: input, shape index: {}]
  %s3 = inlined_call_operand.hbm [shape: f32[2,8,128], index: 3, kind: output, shape index: {}]
  %s4 = sld [smem:[#allocation0]]
  $region57: #{tpu_custom_call.1} parent=0
    _
  %s6 = ssub.s32 1, %s4
  %s7 = scalar_select 0, %s6, %s4
  $region1: #{tpu_custom_call.1} parent=0
    #allocation2 [shape = 'u8[65536]{0}', space=vmem, size = 0x10000, scoped, tag = 'input window, operand 0']
    #allocation3 [shape = 's32[2]{0}', space=sflag, size = 0x8, scoped, tag = 'scoped memory for tpu_custom_call.1']
    #allocation4 [shape = 's32[2]{0}', space=sflag, size = 0x8, scoped, tag = 'scoped memory for tpu_custom_call.1']
    #allocation5 [shape = 'u8[65536]{0}', space=vmem, size = 0x10000, scoped, tag = 'input window, operand 1']
    #allocation6 [shape = 's32[2]{0}', space=sflag, size = 0x8, scoped, tag = 'scoped memory for tpu_custom_call.1']
    #allocation7 [shape = 'u8[65536]{0}', space=vmem, size = 0x10000, scoped, tag = 'input window, operand 2']
    #allocation8 [shape = 'u8[8192]{0}', space=vmem, size = 0x2000, scoped, tag = 'output window, operand 0']
    %8 = vsyncpa [#allocation3], 0
    %s9 = scalar_lea.sflag [#allocation3], 1
    %10 = vsyncpa %s9, 0
    %11 = vsyncpa [#allocation6], 0
    %s12 = scalar_lea.sflag [#allocation6], 1
    %13 = vsyncpa %s12, 0
    %14 = vsyncpa [#allocation4], 0
    %s15 = scalar_lea.sflag [#allocation4], 1
    %16 = vsyncpa %s15, 0
    loop: start=0, step=1, limit=4
    $region2: #{tpu_custom_call.1} parent=1 // loop_pre_header
      _
    $region3: #{tpu_custom_call.1} parent=1 // loop_header
      %s18 = sphi 0, %s22
      %p19 = scmp.ge.s32.totalorder %s18, 4
      %s28 = sphi 0, %s30
      %s31 = sphi 0, %s28
      %s32 = sphi 0, %s31
      %s48 = sphi 0, %s32
      %s54 = sphi 0, %s56
      %s57 = sphi 0, %s54
      %s58 = sphi 0, %s57
      %s74 = sphi 0, %s58
      %s80 = sphi 0, %s82
      %s83 = sphi 0, %s80
      %s84 = sphi 0, %s83
      %s100 = sphi 0, %s84
      %s106 = sphi 0, %s108
      %s109 = sphi 0, %s106
      %s110 = sphi 0, %s109
      %s126 = sphi 0, %s110
    $region4: #{tpu_custom_call.1} parent=1 // loop_header_branch
      %21 = sbr.rel (%p19) target = $region8
    $region5: #{tpu_custom_call.1} parent=1 // loop_body
      %s23 = ssub.s32 %s18, 1
      %s24 = ssub.s32 %s18, 2
      %s25 = sadd.s32 %s18, 1
      %s26 = ssub.s32 %s18, %s25
      %p27 = scmp.eq.s32.totalorder %s26, 0
      %s29 = sadd.s32 %s28, 1
      %s30 = scalar_select %p27, %s28, %s29
      %p33 = pneg %p27
      %p34 = scmp.eq.s32.totalorder %s18, 1
      %p35 = por %p33, %p34
      %p36 = scmp.ne.s32.totalorder %s28, %s31
      %p37 = scmp.eq.s32.totalorder %s18, 0
      %p38 = por %p36, %p37
      %p39 = scmp.ne.s32.totalorder %s28, %s31
      %p40 = scmp.eq.s32.totalorder %s23, 1
      %p41 = por %p39, %p40
      %p42 = scmp.ne.s32.totalorder %s31, %s32
      %p43 = scmp.eq.s32.totalorder %s23, 0
      %p44 = por %p42, %p43
      %p45 = scmp.ne.s32.totalorder %s31, %s32
      %p46 = scmp.eq.s32.totalorder %s24, 1
      %p47 = por %p45, %p46
      %p49 = scmp.ne.s32.totalorder %s32, %s48
      %p50 = scmp.eq.s32.totalorder %s24, 0
      %p51 = por %p49, %p50
      %s52 = ssub.s32 %s18, %s25
      %p53 = scmp.eq.s32.totalorder %s52, 0
      %s55 = sadd.s32 %s54, 1
      %s56 = scalar_select %p53, %s54, %s55
      %p59 = pneg %p53
      %p60 = scmp.eq.s32.totalorder %s18, 1
      %p61 = por %p59, %p60
      %p62 = scmp.ne.s32.totalorder %s54, %s57
      %p63 = scmp.eq.s32.totalorder %s18, 0
      %p64 = por %p62, %p63
      %p65 = scmp.ne.s32.totalorder %s54, %s57
      %p66 = scmp.eq.s32.totalorder %s23, 1
      %p67 = por %p65, %p66
      %p68 = scmp.ne.s32.totalorder %s57, %s58
      %p69 = scmp.eq.s32.totalorder %s23, 0
      %p70 = por %p68, %p69
      %p71 = scmp.ne.s32.totalorder %s57, %s58
      %p72 = scmp.eq.s32.totalorder %s24, 1
      %p73 = por %p71, %p72
      %p75 = scmp.ne.s32.totalorder %s58, %s74
      %p76 = scmp.eq.s32.totalorder %s24, 0
      %p77 = por %p75, %p76
      %s78 = ssub.s32 %s18, %s25
      %p79 = scmp.eq.s32.totalorder %s78, 0
      %s81 = sadd.s32 %s80, 1
      %s82 = scalar_select %p79, %s80, %s81
      %p85 = pneg %p79
      %p86 = scmp.eq.s32.totalorder %s18, 1
      %p87 = por %p85, %p86
      %p88 = scmp.ne.s32.totalorder %s80, %s83
      %p89 = scmp.eq.s32.totalorder %s18, 0
      %p90 = por %p88, %p89
      %p91 = scmp.ne.s32.totalorder %s80, %s83
      %p92 = scmp.eq.s32.totalorder %s23, 1
      %p93 = por %p91, %p92
      %p94 = scmp.ne.s32.totalorder %s83, %s84
      %p95 = scmp.eq.s32.totalorder %s23, 0
      %p96 = por %p94, %p95
      %p97 = scmp.ne.s32.totalorder %s83, %s84
      %p98 = scmp.eq.s32.totalorder %s24, 1
      %p99 = por %p97, %p98
      %p101 = scmp.ne.s32.totalorder %s84, %s100
      %p102 = scmp.eq.s32.totalorder %s24, 0
      %p103 = por %p101, %p102
      %s104 = ssub.s32 %s18, %s25
      %p105 = scmp.eq.s32.totalorder %s104, 0
      %s107 = sadd.s32 %s106, 1
      %s108 = scalar_select %p105, %s106, %s107
      %p111 = pneg %p105
      %p112 = scmp.eq.s32.totalorder %s18, 1
      %p113 = por %p111, %p112
      %p114 = scmp.ne.s32.totalorder %s106, %s109
      %p115 = scmp.eq.s32.totalorder %s18, 0
      %p116 = por %p114, %p115
      %p117 = scmp.ne.s32.totalorder %s106, %s109
      %p118 = scmp.eq.s32.totalorder %s23, 1
      %p119 = por %p117, %p118
      %p120 = scmp.ne.s32.totalorder %s109, %s110
      %p121 = scmp.eq.s32.totalorder %s23, 0
      %p122 = por %p120, %p121
      %p123 = scmp.ne.s32.totalorder %s109, %s110
      %p124 = scmp.eq.s32.totalorder %s24, 1
      %p125 = por %p123, %p124
      %p127 = scmp.ne.s32.totalorder %s110, %s126
      %p128 = scmp.eq.s32.totalorder %s24, 0
      %p129 = por %p127, %p128
      %p130 = scmp.le.s32.totalorder 1, %s18
      %p131 = scmp.lt.s32.totalorder %s18, 3
      %p132 = pnand %p130, %p131
      %p133 = pneg %p132
      // Predicated region
      $region9: #{tpu_custom_call.1} parent=5 // pred_check
        _
      $region10: #{tpu_custom_call.1} parent=5 // pred_check_branch
        %135 = sbr.rel (%p132) target = $region12
      $region11: #{tpu_custom_call.1} parent=5 // pred_region
        %s136 = ssub.s32 %s18, 1
      $region12: #{tpu_custom_call.1} parent=5 // pred_fallthru
        _
      %p137 = scmp.lt.s32.totalorder %s18, 2
      // Predicated region
      $region13: #{tpu_custom_call.1} parent=5 // pred_check
        %p138 = pneg %p137
      $region14: #{tpu_custom_call.1} parent=5 // pred_check_branch
        %140 = sbr.rel (%p138) target = $region16
      $region15: #{tpu_custom_call.1} parent=5 // pred_region
        // Predicated region
        $region17: #{tpu_custom_call.1} parent=15 // pred_check
          %p141 = pneg %p38
        $region18: #{tpu_custom_call.1} parent=15 // pred_check_branch
          %143 = sbr.rel (%p141) target = $region20
        $region19: #{tpu_custom_call.1} parent=15 // pred_region
          %s144 = sand.u32 %s28, 1
          %s145 = scalar_lea.sflag [#allocation3], %s144
          %s146 = sand.u32 %s28, 1
          %s147 = smul.addr %s146, 64
          %s148 = scalar_lea.vmem [#allocation2], %s147
          %150 = vsyncadd %s145, 0
          %s151 = smul.addr %s18, 8
          %s152 = smul.addr %s151, 8
          %s153 = scalar_lea.hbm %s0, %s152
          %s154 = sshll.u32 %s153, 4
          %s155 = int_to_ptr.hbm [resolvable:$true] %s154
          %s156 = sshll.u32 %s148, 4
          %s157 = int_to_ptr.vmem [resolvable:$true] %s156
          %162 = dma.hbm_to_vmem [thread:$0]  %s155, 1024, %s157, %s145, 128, 128, 8
        $region20: #{tpu_custom_call.1} parent=15 // pred_fallthru
          _
        // Predicated region
        $region21: #{tpu_custom_call.1} parent=15 // pred_check
          %p163 = pneg %p64
        $region22: #{tpu_custom_call.1} parent=15 // pred_check_branch
          %165 = sbr.rel (%p163) target = $region24
        $region23: #{tpu_custom_call.1} parent=15 // pred_region
          %s166 = sand.u32 %s18, 1
          %s167 = scalar_lea.sflag [#allocation6], %s166
          %s168 = sand.u32 %s54, 1
          %s169 = smul.addr %s168, 64
          %s170 = scalar_lea.vmem [#allocation5], %s169
          %172 = vsyncadd %s167, 0
          %s173 = smul.addr %s18, 8
          %s174 = smul.addr %s173, 8
          %s175 = scalar_lea.hbm %s1, %s174
          %s176 = sshll.u32 %s175, 4
          %s177 = int_to_ptr.hbm [resolvable:$true] %s176
          %s178 = sshll.u32 %s170, 4
          %s179 = int_to_ptr.vmem [resolvable:$true] %s178
          %184 = dma.hbm_to_vmem [thread:$0]  %s177, 1024, %s179, %s167, 128, 128, 8
        $region24: #{tpu_custom_call.1} parent=15 // pred_fallthru
          _
        // Predicated region
        $region25: #{tpu_custom_call.1} parent=15 // pred_check
          %p185 = pneg %p90
        $region26: #{tpu_custom_call.1} parent=15 // pred_check_branch
          %187 = sbr.rel (%p185) target = $region28
        $region27: #{tpu_custom_call.1} parent=15 // pred_region
          %s188 = sand.u32 %s18, 1
          %s189 = scalar_lea.sflag [#allocation6], %s188
          %s190 = sand.u32 %s80, 1
          %s191 = smul.addr %s190, 64
          %s192 = scalar_lea.vmem [#allocation7], %s191
          %194 = vsyncadd %s189, 0
          %s195 = smul.addr %s18, 8
          %s196 = smul.addr %s195, 8
          %s197 = scalar_lea.hbm %s2, %s196
          %s198 = sshll.u32 %s197, 4
          %s199 = int_to_ptr.hbm [resolvable:$true] %s198
          %s200 = sshll.u32 %s192, 4
          %s201 = int_to_ptr.vmem [resolvable:$true] %s200
          %206 = dma.hbm_to_vmem [thread:$0]  %s199, 1024, %s201, %s189, 128, 128, 8
        $region28: #{tpu_custom_call.1} parent=15 // pred_fallthru
          _
      $region16: #{tpu_custom_call.1} parent=5 // pred_fallthru
        _
      %p207 = scmp.le.s32.totalorder 1, %s18
      %p208 = scmp.lt.s32.totalorder %s18, 3
      %p209 = pnand %p207, %p208
      %p210 = pneg %p209
      // Predicated region
      $region29: #{tpu_custom_call.1} parent=5 // pred_check
        _
      $region30: #{tpu_custom_call.1} parent=5 // pred_check_branch
        %212 = sbr.rel (%p209) target = $region32
      $region31: #{tpu_custom_call.1} parent=5 // pred_region
        %s213 = ssub.s32 %s18, 1
        %s214 = sand.u32 %s31, 1
        %s215 = scalar_lea.sflag [#allocation3], %s214
        %s216 = sand.u32 %s31, 1
        %s217 = smul.addr %s216, 64
        %s218 = scalar_lea.vmem [#allocation2], %s217
        // Predicated region
        $region33: #{tpu_custom_call.1} parent=31 // pred_check
          %p219 = pneg %p44
        $region34: #{tpu_custom_call.1} parent=31 // pred_check_branch
          %221 = sbr.rel (%p219) target = $region36
        $region35: #{tpu_custom_call.1} parent=31 // pred_region
          %223 = dma.done %s215, 1024
        $region36: #{tpu_custom_call.1} parent=31 // pred_fallthru
          _
        %s224 = sand.u32 %s23, 1
        %s225 = scalar_lea.sflag [#allocation6], %s224
        %s226 = sand.u32 %s57, 1
        %s227 = smul.addr %s226, 64
        %s228 = scalar_lea.vmem [#allocation5], %s227
        // Predicated region
        $region37: #{tpu_custom_call.1} parent=31 // pred_check
          %p229 = pneg %p70
        $region38: #{tpu_custom_call.1} parent=31 // pred_check_branch
          %231 = sbr.rel (%p229) target = $region40
        $region39: #{tpu_custom_call.1} parent=31 // pred_region
          %233 = dma.done %s225, 1024
        $region40: #{tpu_custom_call.1} parent=31 // pred_fallthru
          _
        %s234 = sand.u32 %s23, 1
        %s235 = scalar_lea.sflag [#allocation6], %s234
        %s236 = sand.u32 %s83, 1
        %s237 = smul.addr %s236, 64
        %s238 = scalar_lea.vmem [#allocation7], %s237
        // Predicated region
        $region41: #{tpu_custom_call.1} parent=31 // pred_check
          %p239 = pneg %p96
        $region42: #{tpu_custom_call.1} parent=31 // pred_check_branch
          %241 = sbr.rel (%p239) target = $region44
        $region43: #{tpu_custom_call.1} parent=31 // pred_region
          %243 = dma.done %s235, 1024
        $region44: #{tpu_custom_call.1} parent=31 // pred_fallthru
          _
        %s244 = sand.u32 %s31, 1
        %s245 = scalar_lea.sflag [#allocation3], %s244
        %s246 = sand.u32 %s31, 1
        %s247 = smul.addr %s246, 64
        %s248 = scalar_lea.vmem [#allocation2], %s247
        %p249 = pneg %p44
        %p250 = pneg %p41
        %s251 = sand.u32 %s23, 1
        %s252 = scalar_lea.sflag [#allocation6], %s251
        %s253 = sand.u32 %s57, 1
        %s254 = smul.addr %s253, 64
        %s255 = scalar_lea.vmem [#allocation5], %s254
        %p256 = pneg %p70
        %p257 = pneg %p67
        %s258 = sand.u32 %s23, 1
        %s259 = scalar_lea.sflag [#allocation6], %s258
        %s260 = sand.u32 %s83, 1
        %s261 = smul.addr %s260, 64
        %s262 = scalar_lea.vmem [#allocation7], %s261
        %p263 = pneg %p96
        %p264 = pneg %p93
        %p265 = pneg %p122
        %p266 = pneg %p119
        %s267 = sand.u32 %s109, 1
        %s268 = scalar_lea.sflag [#allocation4], %s267
        %s269 = sand.u32 %s109, 1
        %s270 = smul.addr %s269, 8
        %s271 = scalar_lea.vmem [#allocation8], %s270
        %v272 = vlaneseq
        %v273 = vshrl.u32 %v272, 7
        %v274 = vld [vmem:[%s218] sm:$0xff]
        %v275 = vld [vmem:[%s218 + $0x8] sm:$0xff]
        %v276 = vld [vmem:[%s218 + $0x10] sm:$0xff]
        %v277 = vld [vmem:[%s218 + $0x18] sm:$0xff]
        %v278 = vld [vmem:[%s218 + $0x20] sm:$0xff]
        %v279 = vld [vmem:[%s218 + $0x28] sm:$0xff]
        %v280 = vld [vmem:[%s218 + $0x30] sm:$0xff]
        %v281 = vld [vmem:[%s218 + $0x38] sm:$0xff]
        %v282 = vld [vmem:[%s228] sm:$0xff]
        %v283 = vld [vmem:[%s228 + $0x8] sm:$0xff]
        %v284 = vld [vmem:[%s228 + $0x10] sm:$0xff]
        %v285 = vld [vmem:[%s228 + $0x18] sm:$0xff]
        %v286 = vld [vmem:[%s228 + $0x20] sm:$0xff]
        %v287 = vld [vmem:[%s228 + $0x28] sm:$0xff]
        %v288 = vld [vmem:[%s228 + $0x30] sm:$0xff]
        %v289 = vld [vmem:[%s228 + $0x38] sm:$0xff]
        %v290 = vld [vmem:[%s238] sm:$0xff]
        %v291 = vld [vmem:[%s238 + $0x8] sm:$0xff]
        %v292 = vld [vmem:[%s238 + $0x10] sm:$0xff]
        %v293 = vld [vmem:[%s238 + $0x18] sm:$0xff]
        %v294 = vld [vmem:[%s238 + $0x20] sm:$0xff]
        %v295 = vld [vmem:[%s238 + $0x28] sm:$0xff]
        %v296 = vld [vmem:[%s238 + $0x30] sm:$0xff]
        %v297 = vld [vmem:[%s238 + $0x38] sm:$0xff]
        %v298 = vsub.f32 %v274, %v282
        %v299 = vsub.f32 %v275, %v283
        %v300 = vsub.f32 %v276, %v284
        %v301 = vsub.f32 %v277, %v285
        %v302 = vsub.f32 %v278, %v286
        %v303 = vsub.f32 %v279, %v287
        %v304 = vsub.f32 %v280, %v288
        %v305 = vsub.f32 %v281, %v289
        %v306 = vmul.f32 %v290, %v298
        %v307 = vmul.f32 %v291, %v299
        %v308 = vmul.f32 %v292, %v300
        %v309 = vmul.f32 %v293, %v301
        %v310 = vmul.f32 %v294, %v302
        %v311 = vmul.f32 %v295, %v303
        %v312 = vmul.f32 %v296, %v304
        %v313 = vmul.f32 %v297, %v305
        %v314 = vlaneseq
        %v315 = vand.u32 %v314, 127
        %v316 = vadd.s32 %v273, 8
        %v317 = vadd.s32 %v273, 16
        %v318 = vadd.s32 %v273, 24
        %v319 = vadd.s32 %v273, 32
        %v320 = vadd.s32 %v273, 40
        %v321 = vadd.s32 %v273, 48
        %v322 = vadd.s32 %v273, 56
        %v323 = vadd.f32 %v290, %v291
        %v324 = vadd.f32 %v323, %v292
        %v325 = vadd.f32 %v324, %v293
        %v326 = vadd.f32 %v325, %v294
        %v327 = vadd.f32 %v326, %v295
        %v328 = vadd.f32 %v327, %v296
        %v329 = vadd.f32 %v328, %v297
        %330 = vadd.xlane.f32.xlu0 %v329
        %v331 = vpop.xlane.xlu0 %330
        %v332 = vrot.slane %v331, 4
        %v333 = vadd.f32 %v331, %v332
        %v334 = vrot.slane %v333, 2
        %v335 = vadd.f32 %v333, %v334
        %v336 = vrot.slane %v335, 1
        %v337 = vadd.f32 %v335, %v336
        %s338 = vtos %v337
        %339 = vrot.lane.b32.xlu0 %v306, 127
        %v340 = vpop.permute.xlu0 %339
        %341 = vrot.lane.b32.xlu0 %v307, 127
        %v342 = vpop.permute.xlu0 %341
        %343 = vrot.lane.b32.xlu0 %v308, 127
        %v344 = vpop.permute.xlu0 %343
        %345 = vrot.lane.b32.xlu0 %v309, 127
        %v346 = vpop.permute.xlu0 %345
        %347 = vrot.lane.b32.xlu0 %v310, 127
        %v348 = vpop.permute.xlu0 %347
        %349 = vrot.lane.b32.xlu0 %v311, 127
        %v350 = vpop.permute.xlu0 %349
        %351 = vrot.lane.b32.xlu0 %v312, 127
        %v352 = vpop.permute.xlu0 %351
        %353 = vrot.lane.b32.xlu0 %v313, 127
        %v354 = vpop.permute.xlu0 %353
        %355 = vrot.lane.b32.xlu0 %v290, 127
        %v356 = vpop.permute.xlu0 %355
        %357 = vrot.lane.b32.xlu0 %v291, 127
        %v358 = vpop.permute.xlu0 %357
        %359 = vrot.lane.b32.xlu0 %v292, 127
        %v360 = vpop.permute.xlu0 %359
        %361 = vrot.lane.b32.xlu0 %v293, 127
        %v362 = vpop.permute.xlu0 %361
        %363 = vrot.lane.b32.xlu0 %v294, 127
        %v364 = vpop.permute.xlu0 %363
        %365 = vrot.lane.b32.xlu0 %v295, 127
        %v366 = vpop.permute.xlu0 %365
        %367 = vrot.lane.b32.xlu0 %v296, 127
        %v368 = vpop.permute.xlu0 %367
        %369 = vrot.lane.b32.xlu0 %v297, 127
        %v370 = vpop.permute.xlu0 %369
        %vm371 = vcmp.lt.s32.totalorder %v315, 127
        %v372 = vsel %vm371, %v290, 0.0
        %v373 = vsel %vm371, %v291, 0.0
        %v374 = vsel %vm371, %v292, 0.0
        %v375 = vsel %vm371, %v293, 0.0
        %v376 = vsel %vm371, %v294, 0.0
        %v377 = vsel %vm371, %v295, 0.0
        %v378 = vsel %vm371, %v296, 0.0
        %v379 = vsel %vm371, %v297, 0.0
        %v380 = vsub.f32 %v340, %v306
        %v381 = vsub.f32 %v342, %v307
        %v382 = vsub.f32 %v344, %v308
        %v383 = vsub.f32 %v346, %v309
        %v384 = vsub.f32 %v348, %v310
        %v385 = vsub.f32 %v350, %v311
        %v386 = vsub.f32 %v352, %v312
        %v387 = vsub.f32 %v354, %v313
        %v388 = vand.u32 2147483647, %v380
        %v389 = vand.u32 2147483647, %v381
        %v390 = vand.u32 2147483647, %v382
        %v391 = vand.u32 2147483647, %v383
        %v392 = vand.u32 2147483647, %v384
        %v393 = vand.u32 2147483647, %v385
        %v394 = vand.u32 2147483647, %v386
        %v395 = vand.u32 2147483647, %v387
        %v396 = vmul.f32 %v388, %v356
        %v397 = vmul.f32 %v389, %v358
        %v398 = vmul.f32 %v390, %v360
        %v399 = vmul.f32 %v391, %v362
        %v400 = vmul.f32 %v392, %v364
        %v401 = vmul.f32 %v393, %v366
        %v402 = vmul.f32 %v394, %v368
        %v403 = vmul.f32 %v395, %v370
        %v404 = vmul.f32 %v396, %v372
        %v405 = vmul.f32 %v397, %v373
        %v406 = vmul.f32 %v398, %v374
        %v407 = vmul.f32 %v399, %v375
        %v408 = vmul.f32 %v400, %v376
        %v409 = vmul.f32 %v401, %v377
        %v410 = vmul.f32 %v402, %v378
        %v411 = vmul.f32 %v403, %v379
        %v412 = vrot.slane %v306, 1
        %v413 = vrot.slane %v307, 1
        %v414 = vrot.slane %v308, 1
        %v415 = vrot.slane %v309, 1
        %v416 = vrot.slane %v310, 1
        %v417 = vrot.slane %v311, 1
        %v418 = vrot.slane %v312, 1
        %v419 = vrot.slane %v313, 1
        %vm420 = vcmp.lt.s32.totalorder %v273, 7
        %v421 = vsel %vm420, %v418, %v419
        %v422 = vsel %vm420, %v417, %v418
        %v423 = vsel %vm420, %v416, %v417
        %v424 = vsel %vm420, %v415, %v416
        %v425 = vsel %vm420, %v414, %v415
        %v426 = vsel %vm420, %v413, %v414
        %v427 = vsel %vm420, %v412, %v413
        %v428 = vsel %vm420, %v419, %v412
        %v429 = vrot.slane %v290, 1
        %v430 = vrot.slane %v291, 1
        %v431 = vrot.slane %v292, 1
        %v432 = vrot.slane %v293, 1
        %v433 = vrot.slane %v294, 1
        %v434 = vrot.slane %v295, 1
        %v435 = vrot.slane %v296, 1
        %v436 = vrot.slane %v297, 1
        %v437 = vsel %vm420, %v435, %v436
        %v438 = vsel %vm420, %v434, %v435
        %v439 = vsel %vm420, %v433, %v434
        %v440 = vsel %vm420, %v432, %v433
        %v441 = vsel %vm420, %v431, %v432
        %v442 = vsel %vm420, %v430, %v431
        %v443 = vsel %vm420, %v429, %v430
        %v444 = vsel %vm420, %v436, %v429
        %vm445 = vcmp.lt.s32.totalorder %v273, 63
        %vm446 = vcmp.lt.s32.totalorder %v316, 63
        %vm447 = vcmp.lt.s32.totalorder %v317, 63
        %vm448 = vcmp.lt.s32.totalorder %v318, 63
        %vm449 = vcmp.lt.s32.totalorder %v319, 63
        %vm450 = vcmp.lt.s32.totalorder %v320, 63
        %vm451 = vcmp.lt.s32.totalorder %v321, 63
        %vm452 = vcmp.lt.s32.totalorder %v322, 63
        %v453 = vsel %vm445, %v290, 0.0
        %v454 = vsel %vm446, %v291, 0.0
        %v455 = vsel %vm447, %v292, 0.0
        %v456 = vsel %vm448, %v293, 0.0
        %v457 = vsel %vm449, %v294, 0.0
        %v458 = vsel %vm450, %v295, 0.0
        %v459 = vsel %vm451, %v296, 0.0
        %v460 = vsel %vm452, %v297, 0.0
        %v461 = vsub.f32 %v427, %v306
        %v462 = vsub.f32 %v426, %v307
        %v463 = vsub.f32 %v425, %v308
        %v464 = vsub.f32 %v424, %v309
        %v465 = vsub.f32 %v423, %v310
        %v466 = vsub.f32 %v422, %v311
        %v467 = vsub.f32 %v421, %v312
        %v468 = vsub.f32 %v428, %v313
        %v469 = vand.u32 2147483647, %v461
        %v470 = vand.u32 2147483647, %v462
        %v471 = vand.u32 2147483647, %v463
        %v472 = vand.u32 2147483647, %v464
        %v473 = vand.u32 2147483647, %v465
        %v474 = vand.u32 2147483647, %v466
        %v475 = vand.u32 2147483647, %v467
        %v476 = vand.u32 2147483647, %v468
        %v477 = vmul.f32 %v469, %v443
        %v478 = vmul.f32 %v470, %v442
        %v479 = vmul.f32 %v471, %v441
        %v480 = vmul.f32 %v472, %v440
        %v481 = vmul.f32 %v473, %v439
        %v482 = vmul.f32 %v474, %v438
        %v483 = vmul.f32 %v475, %v437
        %v484 = vmul.f32 %v476, %v444
        %v485 = vmul.f32 %v477, %v453
        %v486 = vmul.f32 %v478, %v454
        %v487 = vmul.f32 %v479, %v455
        %v488 = vmul.f32 %v480, %v456
        %v489 = vmul.f32 %v481, %v457
        %v490 = vmul.f32 %v482, %v458
        %v491 = vmul.f32 %v483, %v459
        %v492 = vmul.f32 %v484, %v460
        %v493 = vadd.f32 %v404, %v485
        %v494 = vadd.f32 %v405, %v486
        %v495 = vadd.f32 %v406, %v487
        %v496 = vadd.f32 %v407, %v488
        %v497 = vadd.f32 %v408, %v489
        %v498 = vadd.f32 %v409, %v490
        %v499 = vadd.f32 %v410, %v491
        %v500 = vadd.f32 %v411, %v492
        %v501 = vadd.f32 %v493, %v494
        %v502 = vadd.f32 %v501, %v495
        %v503 = vadd.f32 %v502, %v496
        %v504 = vadd.f32 %v503, %v497
        %v505 = vadd.f32 %v504, %v498
        %v506 = vadd.f32 %v505, %v499
        %v507 = vadd.f32 %v506, %v500
        %508 = vadd.xlane.f32.xlu0 %v507
        %v509 = vpop.xlane.xlu0 %508
        %v510 = vrot.slane %v509, 4
        %v511 = vadd.f32 %v509, %v510
        %v512 = vrot.slane %v511, 2
        %v513 = vadd.f32 %v511, %v512
        %v514 = vrot.slane %v513, 1
        %v515 = vadd.f32 %v513, %v514
        %s516 = vtos %v515
        %vm517 = vcmp.eq.s32.totalorder %v273, 0
        %v518 = vstv %s516
        %v519 = vsel %vm517, %v518, 0.0
        %vm520 = vcmp.eq.s32.totalorder %v273, 4
        %v521 = vstv %s338
        %v522 = vsel %vm520, %v521, %v519
        %v523 = vld [vmem:[%s218] ss:$2 sm:$0xff]
        %s524 = scalar_lea.vmem %s218, 16 [#allocation2]
        %v525 = vld [vmem:[%s524] ss:$2 sm:$0xff]
        %s526 = scalar_lea.vmem %s218, 32 [#allocation2]
        %v527 = vld [vmem:[%s526] ss:$2 sm:$0xff]
        %s528 = scalar_lea.vmem %s218, 48 [#allocation2]
        %v529 = vld [vmem:[%s528] ss:$2 sm:$0xff]
        %v530 = vld [vmem:[%s228] ss:$2 sm:$0xff]
        %s531 = scalar_lea.vmem %s228, 16 [#allocation5]
        %v532 = vld [vmem:[%s531] ss:$2 sm:$0xff]
        %s533 = scalar_lea.vmem %s228, 32 [#allocation5]
        %v534 = vld [vmem:[%s533] ss:$2 sm:$0xff]
        %s535 = scalar_lea.vmem %s228, 48 [#allocation5]
        %v536 = vld [vmem:[%s535] ss:$2 sm:$0xff]
        %v537 = vld [vmem:[%s238] ss:$2 sm:$0xff]
        %s538 = scalar_lea.vmem %s238, 16 [#allocation7]
        %v539 = vld [vmem:[%s538] ss:$2 sm:$0xff]
        %s540 = scalar_lea.vmem %s238, 32 [#allocation7]
        %v541 = vld [vmem:[%s540] ss:$2 sm:$0xff]
        %s542 = scalar_lea.vmem %s238, 48 [#allocation7]
        %v543 = vld [vmem:[%s542] ss:$2 sm:$0xff]
        %v544 = vsub.f32 %v523, %v530
        %v545 = vsub.f32 %v525, %v532
        %v546 = vsub.f32 %v527, %v534
        %v547 = vsub.f32 %v529, %v536
        %v548 = vmul.f32 %v537, %v544
        %v549 = vmul.f32 %v539, %v545
        %v550 = vmul.f32 %v541, %v546
        %v551 = vmul.f32 %v543, %v547
        %v552 = vand.u32 %v315, 1
        %vm553 = vcmp.eq.s32.totalorder %v552, 0
        %v554 = vsel %vm553, %v537, 0.0
        %v555 = vsel %vm553, %v539, 0.0
        %v556 = vsel %vm553, %v541, 0.0
        %v557 = vsel %vm553, %v543, 0.0
        %v558 = vadd.f32 %v554, %v555
        %v559 = vadd.f32 %v558, %v556
        %v560 = vadd.f32 %v559, %v557
        %561 = vadd.xlane.f32.xlu0 %v560
        %v562 = vpop.xlane.xlu0 %561
        %v563 = vrot.slane %v562, 4
        %v564 = vadd.f32 %v562, %v563
        %v565 = vrot.slane %v564, 2
        %v566 = vadd.f32 %v564, %v565
        %v567 = vrot.slane %v566, 1
        %v568 = vadd.f32 %v566, %v567
        %s569 = vtos %v568
        %570 = vrot.lane.b32.xlu0 %v548, 126
        %v571 = vpop.permute.xlu0 %570
        %572 = vrot.lane.b32.xlu0 %v549, 126
        %v573 = vpop.permute.xlu0 %572
        %574 = vrot.lane.b32.xlu0 %v550, 126
        %v575 = vpop.permute.xlu0 %574
        %576 = vrot.lane.b32.xlu0 %v551, 126
        %v577 = vpop.permute.xlu0 %576
        %578 = vrot.lane.b32.xlu0 %v537, 126
        %v579 = vpop.permute.xlu0 %578
        %580 = vrot.lane.b32.xlu0 %v539, 126
        %v581 = vpop.permute.xlu0 %580
        %582 = vrot.lane.b32.xlu0 %v541, 126
        %v583 = vpop.permute.xlu0 %582
        %584 = vrot.lane.b32.xlu0 %v543, 126
        %v585 = vpop.permute.xlu0 %584
        %vm586 = vcmp.lt.s32.totalorder %v315, 126
        %v587 = vsel %vm586, %v554, 0.0
        %v588 = vsel %vm586, %v555, 0.0
        %v589 = vsel %vm586, %v556, 0.0
        %v590 = vsel %vm586, %v557, 0.0
        %v591 = vsub.f32 %v571, %v548
        %v592 = vsub.f32 %v573, %v549
        %v593 = vsub.f32 %v575, %v550
        %v594 = vsub.f32 %v577, %v551
        %v595 = vand.u32 2147483647, %v591
        %v596 = vand.u32 2147483647, %v592
        %v597 = vand.u32 2147483647, %v593
        %v598 = vand.u32 2147483647, %v594
        %v599 = vmul.f32 %v595, %v579
        %v600 = vmul.f32 %v596, %v581
        %v601 = vmul.f32 %v597, %v583
        %v602 = vmul.f32 %v598, %v585
        %v603 = vmul.f32 %v599, %v587
        %v604 = vmul.f32 %v600, %v588
        %v605 = vmul.f32 %v601, %v589
        %v606 = vmul.f32 %v602, %v590
        %v607 = vrot.slane %v548, 1
        %v608 = vrot.slane %v549, 1
        %v609 = vrot.slane %v550, 1
        %v610 = vrot.slane %v551, 1
        %v611 = vsel %vm420, %v609, %v610
        %v612 = vsel %vm420, %v608, %v609
        %v613 = vsel %vm420, %v607, %v608
        %v614 = vsel %vm420, %v610, %v607
        %v615 = vrot.slane %v537, 1
        %v616 = vrot.slane %v539, 1
        %v617 = vrot.slane %v541, 1
        %v618 = vrot.slane %v543, 1
        %v619 = vsel %vm420, %v617, %v618
        %v620 = vsel %vm420, %v616, %v617
        %v621 = vsel %vm420, %v615, %v616
        %v622 = vsel %vm420, %v618, %v615
        %vm623 = vcmp.lt.s32.totalorder %v273, 31
        %vm624 = vcmp.lt.s32.totalorder %v316, 31
        %vm625 = vcmp.lt.s32.totalorder %v317, 31
        %vm626 = vcmp.lt.s32.totalorder %v318, 31
        %v627 = vsel %vm623, %v554, 0.0
        %v628 = vsel %vm624, %v555, 0.0
        %v629 = vsel %vm625, %v556, 0.0
        %v630 = vsel %vm626, %v557, 0.0
        %v631 = vsub.f32 %v613, %v548
        %v632 = vsub.f32 %v612, %v549
        %v633 = vsub.f32 %v611, %v550
        %v634 = vsub.f32 %v614, %v551
        %v635 = vand.u32 2147483647, %v631
        %v636 = vand.u32 2147483647, %v632
        %v637 = vand.u32 2147483647, %v633
        %v638 = vand.u32 2147483647, %v634
        %v639 = vmul.f32 %v635, %v621
        %v640 = vmul.f32 %v636, %v620
        %v641 = vmul.f32 %v637, %v619
        %v642 = vmul.f32 %v638, %v622
        %v643 = vmul.f32 %v639, %v627
        %v644 = vmul.f32 %v640, %v628
        %v645 = vmul.f32 %v641, %v629
        %v646 = vmul.f32 %v642, %v630
        %v647 = vadd.f32 %v603, %v643
        %v648 = vadd.f32 %v604, %v644
        %v649 = vadd.f32 %v605, %v645
        %v650 = vadd.f32 %v606, %v646
        %v651 = vadd.f32 %v647, %v648
        %v652 = vadd.f32 %v651, %v649
        %v653 = vadd.f32 %v652, %v650
        %654 = vadd.xlane.f32.xlu0 %v653
        %v655 = vpop.xlane.xlu0 %654
        %v656 = vrot.slane %v655, 4
        %v657 = vadd.f32 %v655, %v656
        %v658 = vrot.slane %v657, 2
        %v659 = vadd.f32 %v657, %v658
        %v660 = vrot.slane %v659, 1
        %v661 = vadd.f32 %v659, %v660
        %s662 = vtos %v661
        %vm663 = vcmp.eq.s32.totalorder %v273, 1
        %v664 = vstv %s662
        %v665 = vsel %vm663, %v664, %v522
        %vm666 = vcmp.eq.s32.totalorder %v273, 5
        %v667 = vstv %s569
        %v668 = vsel %vm666, %v667, %v665
        %v669 = vld [vmem:[%s218] ss:$4 sm:$0xff]
        %v670 = vld [vmem:[%s526] ss:$4 sm:$0xff]
        %v671 = vld [vmem:[%s228] ss:$4 sm:$0xff]
        %v672 = vld [vmem:[%s533] ss:$4 sm:$0xff]
        %v673 = vld [vmem:[%s238] ss:$4 sm:$0xff]
        %v674 = vld [vmem:[%s540] ss:$4 sm:$0xff]
        %v675 = vsub.f32 %v669, %v671
        %v676 = vsub.f32 %v670, %v672
        %v677 = vmul.f32 %v673, %v675
        %v678 = vmul.f32 %v674, %v676
        %v679 = vand.u32 %v315, 3
        %vm680 = vcmp.eq.s32.totalorder %v679, 0
        %v681 = vsel %vm680, %v673, 0.0
        %v682 = vsel %vm680, %v674, 0.0
        %v683 = vadd.f32 %v681, %v682
        %684 = vadd.xlane.f32.xlu0 %v683
        %v685 = vpop.xlane.xlu0 %684
        %v686 = vrot.slane %v685, 4
        %v687 = vadd.f32 %v685, %v686
        %v688 = vrot.slane %v687, 2
        %v689 = vadd.f32 %v687, %v688
        %v690 = vrot.slane %v689, 1
        %v691 = vadd.f32 %v689, %v690
        %s692 = vtos %v691
        %693 = vrot.lane.b32.xlu0 %v677, 124
        %v694 = vpop.permute.xlu0 %693
        %695 = vrot.lane.b32.xlu0 %v678, 124
        %v696 = vpop.permute.xlu0 %695
        %697 = vrot.lane.b32.xlu0 %v673, 124
        %v698 = vpop.permute.xlu0 %697
        %699 = vrot.lane.b32.xlu0 %v674, 124
        %v700 = vpop.permute.xlu0 %699
        %vm701 = vcmp.lt.s32.totalorder %v315, 124
        %v702 = vsel %vm701, %v681, 0.0
        %v703 = vsel %vm701, %v682, 0.0
        %v704 = vsub.f32 %v694, %v677
        %v705 = vsub.f32 %v696, %v678
        %v706 = vand.u32 2147483647, %v704
        %v707 = vand.u32 2147483647, %v705
        %v708 = vmul.f32 %v706, %v698
        %v709 = vmul.f32 %v707, %v700
        %v710 = vmul.f32 %v708, %v702
        %v711 = vmul.f32 %v709, %v703
        %v712 = vrot.slane %v677, 1
        %v713 = vrot.slane %v678, 1
        %v714 = vsel %vm420, %v712, %v713
        %v715 = vsel %vm420, %v713, %v712
        %v716 = vrot.slane %v673, 1
        %v717 = vrot.slane %v674, 1
        %v718 = vsel %vm420, %v716, %v717
        %v719 = vsel %vm420, %v717, %v716
        %vm720 = vcmp.lt.s32.totalorder %v273, 15
        %vm721 = vcmp.lt.s32.totalorder %v316, 15
        %v722 = vsel %vm720, %v681, 0.0
        %v723 = vsel %vm721, %v682, 0.0
        %v724 = vsub.f32 %v714, %v677
        %v725 = vsub.f32 %v715, %v678
        %v726 = vand.u32 2147483647, %v724
        %v727 = vand.u32 2147483647, %v725
        %v728 = vmul.f32 %v726, %v718
        %v729 = vmul.f32 %v727, %v719
        %v730 = vmul.f32 %v728, %v722
        %v731 = vmul.f32 %v729, %v723
        %v732 = vadd.f32 %v710, %v730
        %v733 = vadd.f32 %v711, %v731
        %v734 = vadd.f32 %v732, %v733
        %735 = vadd.xlane.f32.xlu0 %v734
        %v736 = vpop.xlane.xlu0 %735
        %v737 = vrot.slane %v736, 4
        %v738 = vadd.f32 %v736, %v737
        %v739 = vrot.slane %v738, 2
        %v740 = vadd.f32 %v738, %v739
        %v741 = vrot.slane %v740, 1
        %v742 = vadd.f32 %v740, %v741
        %s743 = vtos %v742
        %vm744 = vcmp.eq.s32.totalorder %v273, 2
        %v745 = vstv %s743
        %v746 = vsel %vm744, %v745, %v668
        %vm747 = vcmp.eq.s32.totalorder %v273, 6
        %v748 = vstv %s692
        %v749 = vsel %vm747, %v748, %v746
        %v750 = vld [vmem:[%s218] ss:$8 sm:$0xf]
        %v751 = vld [vmem:[%s218] ss:$8 sm:$0xf0]
        %v752 = vor.u32 %v750, %v751
        %v753 = vld [vmem:[%s228] ss:$8 sm:$0xf]
        %v754 = vld [vmem:[%s228] ss:$8 sm:$0xf0]
        %v755 = vor.u32 %v753, %v754
        %v756 = vld [vmem:[%s238] ss:$8 sm:$0xf]
        %v757 = vld [vmem:[%s238] ss:$8 sm:$0xf0]
        %v758 = vor.u32 %v756, %v757
        %v759 = vsub.f32 %v752, %v755
        %v760 = vmul.f32 %v758, %v759
        %v761 = vand.u32 %v315, 7
        %vm762 = vcmp.eq.s32.totalorder %v761, 0
        %v763 = vsel %vm762, %v758, 0.0
        %764 = vadd.xlane.f32.xlu0 %v763
        %v765 = vpop.xlane.xlu0 %764
        %v766 = vrot.slane %v765, 4
        %v767 = vadd.f32 %v765, %v766
        %v768 = vrot.slane %v767, 2
        %v769 = vadd.f32 %v767, %v768
        %v770 = vrot.slane %v769, 1
        %v771 = vadd.f32 %v769, %v770
        %s772 = vtos %v771
        %773 = vrot.lane.b32.xlu0 %v760, 120
        %v774 = vpop.permute.xlu0 %773
        %775 = vrot.lane.b32.xlu0 %v758, 120
        %v776 = vpop.permute.xlu0 %775
        %vm777 = vcmp.lt.s32.totalorder %v315, 120
        %v778 = vsel %vm777, %v763, 0.0
        %v779 = vsub.f32 %v774, %v760
        %v780 = vand.u32 2147483647, %v779
        %v781 = vmul.f32 %v780, %v776
        %v782 = vmul.f32 %v781, %v778
        %v783 = vrot.slane %v760, 1
        %v784 = vrot.slane %v758, 1
        %v785 = vsel %vm420, %v763, 0.0
        %v786 = vsub.f32 %v783, %v760
        %v787 = vand.u32 2147483647, %v786
        %v788 = vmul.f32 %v787, %v784
        %v789 = vmul.f32 %v788, %v785
        %v790 = vadd.f32 %v782, %v789
        %791 = vadd.xlane.f32.xlu0 %v790
        %v792 = vpop.xlane.xlu0 %791
        %v793 = vrot.slane %v792, 4
        %v794 = vadd.f32 %v792, %v793
        %v795 = vrot.slane %v794, 2
        %v796 = vadd.f32 %v794, %v795
        %v797 = vrot.slane %v796, 1
        %v798 = vadd.f32 %v796, %v797
        %s799 = vtos %v798
        %vm800 = vcmp.eq.s32.totalorder %v273, 3
        %v801 = vstv %s799
        %v802 = vsel %vm800, %v801, %v749
        %vm803 = vcmp.eq.s32.totalorder %v273, 7
        %v804 = vstv %s772
        %v805 = vsel %vm803, %v804, %v802
        %806 = vst [vmem:[%s271] sm:$0xff] %v805
        %s807 = sand.u32 %s109, 1
        %s808 = scalar_lea.sflag [#allocation4], %s807
        %s809 = sand.u32 %s109, 1
        %s810 = smul.addr %s809, 8
        %s811 = scalar_lea.vmem [#allocation8], %s810
        // Predicated region
        $region45: #{tpu_custom_call.1} parent=31 // pred_check
          %p812 = pneg %p119
        $region46: #{tpu_custom_call.1} parent=31 // pred_check_branch
          %814 = sbr.rel (%p812) target = $region48
        $region47: #{tpu_custom_call.1} parent=31 // pred_region
          %816 = vsyncadd %s808, 0
          %s817 = smul.addr %s23, 8
          %s818 = scalar_lea.hbm %s3, %s817
          %s820 = sshll.u32 %s811, 4
          %s821 = int_to_ptr.vmem [resolvable:$true] %s820
          %s822 = sshll.u32 %s818, 4
          %s823 = int_to_ptr.hbm [resolvable:$true] %s822
          %825 = dma.vmem_to_hbm [thread:$0]  %s821, 128, %s823, %s808
        $region48: #{tpu_custom_call.1} parent=31 // pred_fallthru
          _
      $region32: #{tpu_custom_call.1} parent=5 // pred_fallthru
        _
      %p826 = scmp.le.s32.totalorder 2, %s18
      // Predicated region
      $region49: #{tpu_custom_call.1} parent=5 // pred_check
        %p827 = pneg %p826
      $region50: #{tpu_custom_call.1} parent=5 // pred_check_branch
        %829 = sbr.rel (%p827) target = $region52
      $region51: #{tpu_custom_call.1} parent=5 // pred_region
        %s830 = ssub.s32 %s18, 2
        // Predicated region
        $region53: #{tpu_custom_call.1} parent=51 // pred_check
          %p831 = pneg %p125
        $region54: #{tpu_custom_call.1} parent=51 // pred_check_branch
          %833 = sbr.rel (%p831) target = $region56
        $region55: #{tpu_custom_call.1} parent=51 // pred_region
          %s834 = sand.u32 %s110, 1
          %s835 = scalar_lea.sflag [#allocation4], %s834
          %s836 = sand.u32 %s110, 1
          %s837 = smul.addr %s836, 8
          %s838 = scalar_lea.vmem [#allocation8], %s837
          %840 = dma.done %s835, 128
        $region56: #{tpu_custom_call.1} parent=51 // pred_fallthru
          _
      $region52: #{tpu_custom_call.1} parent=5 // pred_fallthru
        _
    $region6: #{tpu_custom_call.1} parent=1 // loop_footer
      %s22 = sadd.s32 1, %s18
    $region7: #{tpu_custom_call.1} parent=1 // loop_footer_branch
      %17 = sbr.rel target = $region3
    $region8: #{tpu_custom_call.1} parent=1 // loop_exit
      _
    %841 = vsyncpa [#allocation3], 1
    %s842 = scalar_lea.sflag [#allocation3], 1
    %843 = vsyncpa %s842, 1
    %844 = vsyncpa [#allocation6], 1
    %s845 = scalar_lea.sflag [#allocation6], 1
    %846 = vsyncpa %s845, 1
    %847 = vsyncpa [#allocation4], 1
    %s848 = scalar_lea.sflag [#allocation4], 1
    %849 = vsyncpa %s848, 1

</llo_original>
